<compile_context>
chip_gen: v7x
topology: tpu7x:2x2x1
jax: 0.10.0
libtpu: 0.0.40
codegen_flags: <defaults>
</compile_context>

<pallas_src>
import functools

import jax
import jax.numpy as jnp
from jax.experimental import pallas as pl
from jax.experimental.pallas import tpu as pltpu

IN_FEATURES = 25
HIDDEN = 128
OUT_FEATURES = 4

MAX_BATCH_TILE = 8192     # overhead-amortizing tile ceiling (review: 4096-8192)
PALLAS_MIN_BATCH = 1024   # below this the pallas_call launch cost dominates


def _round_up(x, m):
    return ((x + m - 1) // m) * m


def _vmem_capacity_bytes():
    """Physical VMEM of the local chip; conservative 64 MiB (v7x) on failure."""
    try:
        info = pltpu.get_tpu_info()
        for name in ("vmem_capacity_bytes", "vmem_size_bytes", "vmem_bytes"):
            v = getattr(info, name, None)
            if v:
                return int(v)
    except Exception:
        pass
    return 64 * 1024 * 1024


def _batch_semantics():
    """CORE_PARALLEL on v7x (2 TCs/chip) so both cores stream HBM; plain
    'parallel' on single-TC v5e/v6e (parallel vs arbitrary is ~neutral there)."""
    try:
        kind = jax.devices()[0].device_kind.lower()
        if "v7" in kind:
            return (pltpu.CORE_PARALLEL,)
    except Exception:
        pass
    return ("parallel",)


def _auto_block_batch(batch, x_itemsize):
    """Largest batch tile whose double-buffered, lane-padded VMEM footprint fits
    in ~half of physical VMEM (=> 64 MiB budget on v5e/v6e, 32 MiB on v7x)."""
    budget = _vmem_capacity_bytes() // 2
    # Per-row VMEM cost (last dims lane-pad to 128 lanes inside VMEM):
    #   x block   : 2 buffers * 128 lanes * itemsize   (25 -> 128 lane pad)
    #   out block : 2 buffers * 128 lanes * 4 B         (4 -> 128 lane pad, f32)
    #   h interm. : 128 * 4 B
    per_row = 2 * 128 * x_itemsize + 2 * 128 * 4 + 128 * 4
    weights = (IN_FEATURES * HIDDEN + HIDDEN + HIDDEN * OUT_FEATURES
               + OUT_FEATURES) * 4
    tb = (budget - weights) // per_row
    tb = max(8, min(MAX_BATCH_TILE, (tb // 8) * 8))
    return min(tb, _round_up(batch, 8))


def _mlp_kernel(x_ref, w1_ref, b1_ref, w2_ref, b2_ref, o_ref):
    # f32 operands + HIGHEST MXU precision: parity with the PyTorch f32 module.
    # The kernel is HBM/overhead bound, so the extra MXU passes are free.
    x = x_ref[...].astype(jnp.float32)                           # (TB, 25)
    h = jnp.dot(x, w1_ref[...], preferred_element_type=jnp.float32,
                precision=jax.lax.Precision.HIGHEST)
    h = jnp.maximum(h + b1_ref[...], 0.0)                        # (TB, 128)
    o = jnp.dot(h, w2_ref[...], preferred_element_type=jnp.float32,
                precision=jax.lax.Precision.HIGHEST)
    o_ref[...] = (o + b2_ref[...]).astype(o_ref.dtype)           # (TB, 4)


def prepare_params(w1, b1, w2, b2):
    """One-time conversion to the kernel layout (hoisted out of the per-call
    path): f32 weights (parity with the PyTorch module; weight bytes are tiny
    and stay VMEM-resident across grid steps), (1, N) f32 biases."""
    return (
        jnp.asarray(w1, jnp.float32),                            # (25, 128)
        jnp.asarray(b1, jnp.float32).reshape(1, HIDDEN),         # (1, 128)
        jnp.asarray(w2, jnp.float32),                            # (128, 4)
        jnp.asarray(b2, jnp.float32).reshape(1, OUT_FEATURES),   # (1, 4)
    )


@functools.partial(jax.jit, static_argnames=("block_batch",))
def deep_q_forward_pallas(state, w1, b1, w2, b2, *, block_batch=None):
    """relu(state @ w1 + b1) @ w2 + b2 -> (B, 4) f32, one fused Pallas kernel.

    `state` is consumed in whatever float dtype it arrives in (no wrapper-side
    astype => no extra HBM pass); the kernel upcasts to f32 in-register.
    If B is not a multiple of the tile, the last block's out-of-bounds rows are
    computed on padding but their output writes are masked by Pallas, so valid
    rows are unaffected (rows are independent through both matmuls).
    """
    B = state.shape[0]
    if block_batch is None:
        tb = _auto_block_batch(B, jnp.dtype(state.dtype).itemsize)
    else:
        tb = int(block_batch)
    tb = max(8, min(tb, _round_up(B, 8)))
    grid = (pl.cdiv(B, tb),)

    return pl.pallas_call(
        _mlp_kernel,
        out_shape=jax.ShapeDtypeStruct((B, OUT_FEATURES), jnp.float32),
        grid=grid,
        in_specs=[
            pl.BlockSpec((tb, IN_FEATURES), lambda i: (i, 0)),       # x: batch-tiled
            pl.BlockSpec((IN_FEATURES, HIDDEN), lambda i: (0, 0)),   # w1: resident
            pl.BlockSpec((1, HIDDEN), lambda i: (0, 0)),             # b1: resident
            pl.BlockSpec((HIDDEN, OUT_FEATURES), lambda i: (0, 0)),  # w2: resident
            pl.BlockSpec((1, OUT_FEATURES), lambda i: (0, 0)),       # b2: resident
        ],
        out_specs=pl.BlockSpec((tb, OUT_FEATURES), lambda i: (i, 0)),
        compiler_params=pltpu.CompilerParams(
            dimension_semantics=_batch_semantics(),
            # Covers the enlarged tile on v5e (16 MiB default scoped limit)
            # while staying inside v7x's 64 MiB physical VMEM.
            vmem_limit_bytes=int(_vmem_capacity_bytes() // 2),
        ),
    )(state, w1, b1, w2, b2)


@jax.jit
def _forward_xla(state, w1, b1, w2, b2):
    x = state.astype(jnp.float32)
    h = jnp.maximum(
        jnp.dot(x, w1, precision=jax.lax.Precision.HIGHEST) + b1, 0.0)
    return jnp.dot(h, w2, precision=jax.lax.Precision.HIGHEST) + b2


def deep_q_forward(state, w1, b1, w2, b2):
    """Dispatcher: for typical DQN batch sizes (1-512) the pallas_call launch
    overhead dominates a sub-microsecond body, so route small batches to XLA."""
    if state.shape[0] < PALLAS_MIN_BATCH:
        return _forward_xla(state, w1, b1, w2, b2)
    return deep_q_forward_pallas(state, w1, b1, w2, b2)


def init_params(key):
    """nn.Linear default init: U(-1/sqrt(fan_in), +1/sqrt(fan_in))."""
    k1, k2, k3, k4 = jax.random.split(key, 4)
    bound1 = 1.0 / jnp.sqrt(jnp.float32(IN_FEATURES))
    bound2 = 1.0 / jnp.sqrt(jnp.float32(HIDDEN))
    w1 = jax.random.uniform(k1, (IN_FEATURES, HIDDEN), jnp.float32, -bound1, bound1)
    b1 = jax.random.uniform(k2, (HIDDEN,), jnp.float32, -bound1, bound1)
    w2 = jax.random.uniform(k3, (HIDDEN, OUT_FEATURES), jnp.float32, -bound2, bound2)
    b2 = jax.random.uniform(k4, (OUT_FEATURES,), jnp.float32, -bound2, bound2)
    return w1, b1, w2, b2


if __name__ == "__main__":
    key = jax.random.PRNGKey(0)
    k_params, k_state = jax.random.split(key)
    w1, b1, w2, b2 = init_params(k_params)
    params = prepare_params(w1, b1, w2, b2)

    def ref_f32(x):
        """Original module math in plain JAX (f32, highest precision)."""
        h = jnp.maximum(
            jnp.dot(x.astype(jnp.float32), params[0],
                    precision=jax.lax.Precision.HIGHEST) + params[1], 0.0)
        return jnp.dot(h, params[2],
                       precision=jax.lax.Precision.HIGHEST) + params[3]

    # 1) Small batch straight through the Pallas kernel (grid=(1,)).
    batch = 8
    state = jax.random.uniform(k_state, (batch, IN_FEATURES), jnp.float32)
    out = jax.block_until_ready(deep_q_forward_pallas(state, *params))
    assert out.shape == (batch, OUT_FEATURES)
    assert out.dtype == jnp.float32
    assert jnp.allclose(out, ref_f32(state), atol=1e-4, rtol=1e-4)

    # 2) Multi-tile grid with a ragged last block (masked writeback), still small.
    batch2 = 600
    state2 = jax.random.uniform(jax.random.PRNGKey(1), (batch2, IN_FEATURES),
                                jnp.float32)
    out2 = jax.block_until_ready(
        deep_q_forward_pallas(state2, *params, block_batch=256))
    assert out2.shape == (batch2, OUT_FEATURES)
    assert jnp.allclose(out2, ref_f32(state2), atol=1e-4, rtol=1e-4)

    # 3) Dispatcher path (small batch -> XLA fallback) matches too.
    out3 = jax.block_until_ready(deep_q_forward(state, *params))
    assert jnp.allclose(out3, ref_f32(state), atol=1e-4, rtol=1e-4)

    print("KERNEL_OK")
</pallas_src>

<mosaic_0001>
module attributes {stable_mosaic.version = 11 : i64} {
  func.func @_mlp_kernel(%arg0: i32, %arg1: memref<8x25xf32, #tpu.memory_space<vmem>>, %arg2: memref<25x128xf32, #tpu.memory_space<vmem>>, %arg3: memref<1x128xf32, #tpu.memory_space<vmem>>, %arg4: memref<128x4xf32, #tpu.memory_space<vmem>>, %arg5: memref<1x4xf32, #tpu.memory_space<vmem>>, %arg6: memref<8x4xf32, #tpu.memory_space<vmem>>) attributes {dimension_semantics = [#tpu.dimension_semantics<parallel>], iteration_bounds = array<i64: 1>, scalar_prefetch = 0 : i64, scratch_operands = 0 : i64, tpu.core_type = #tpu.core_type<tc>, window_params = [{transform_indices = @transform_0, window_bounds = array<i64: 8, 25>}, {pipeline_mode = #tpu.pipeline_mode<synchronous>, transform_indices = @transform_1, window_bounds = array<i64: 25, 128>}, {pipeline_mode = #tpu.pipeline_mode<synchronous>, transform_indices = @transform_2, window_bounds = array<i64: 1, 128>}, {pipeline_mode = #tpu.pipeline_mode<synchronous>, transform_indices = @transform_3, window_bounds = array<i64: 128, 4>}, {pipeline_mode = #tpu.pipeline_mode<synchronous>, transform_indices = @transform_4, window_bounds = array<i64: 1, 4>}, {transform_indices = @transform_5, window_bounds = array<i64: 8, 4>}]} {
    %c0 = arith.constant 0 : index
    %c0_0 = arith.constant 0 : index
    %0 = vector.load %arg1[%c0, %c0_0] : memref<8x25xf32, #tpu.memory_space<vmem>>, vector<8x25xf32>
    %c0_1 = arith.constant 0 : index
    %c0_2 = arith.constant 0 : index
    %1 = vector.load %arg2[%c0_1, %c0_2] : memref<25x128xf32, #tpu.memory_space<vmem>>, vector<25x128xf32>
    %cst = arith.constant dense<0.000000e+00> : vector<8x128xf32>
    %2 = tpu.matmul %0, %1, %cst {dimension_numbers = #tpu.dot_dimension_numbers<[1], [0], [0], [1], [0, 0, 1, 1], [], []>, precision = #tpu.contract_precision<fp32>} : vector<8x25xf32>, vector<25x128xf32>, vector<8x128xf32> -> vector<8x128xf32>
    %c0_3 = arith.constant 0 : index
    %c0_4 = arith.constant 0 : index
    %3 = vector.load %arg3[%c0_3, %c0_4] : memref<1x128xf32, #tpu.memory_space<vmem>>, vector<1x128xf32>
    %4 = vector.broadcast %3 : vector<1x128xf32> to vector<8x128xf32>
    %5 = arith.addf %2, %4 : vector<8x128xf32>
    %cst_5 = arith.constant 0.000000e+00 : f32
    %6 = vector.broadcast %cst_5 : f32 to vector<8x128xf32>
    %7 = arith.maximumf %5, %6 : vector<8x128xf32>
    %c0_6 = arith.constant 0 : index
    %c0_7 = arith.constant 0 : index
    %8 = vector.load %arg4[%c0_6, %c0_7] : memref<128x4xf32, #tpu.memory_space<vmem>>, vector<128x4xf32>
    %cst_8 = arith.constant dense<0.000000e+00> : vector<8x4xf32>
    %9 = tpu.matmul %7, %8, %cst_8 {dimension_numbers = #tpu.dot_dimension_numbers<[1], [0], [0], [1], [0, 0, 1, 1], [], []>, precision = #tpu.contract_precision<fp32>} : vector<8x128xf32>, vector<128x4xf32>, vector<8x4xf32> -> vector<8x4xf32>
    %c0_9 = arith.constant 0 : index
    %c0_10 = arith.constant 0 : index
    %10 = vector.load %arg5[%c0_9, %c0_10] : memref<1x4xf32, #tpu.memory_space<vmem>>, vector<1x4xf32>
    %11 = vector.broadcast %10 : vector<1x4xf32> to vector<8x4xf32>
    %12 = arith.addf %9, %11 : vector<8x4xf32>
    %c0_11 = arith.constant 0 : index
    %c0_12 = arith.constant 0 : index
    %13 = vector.load %arg6[%c0_11, %c0_12] : memref<8x4xf32, #tpu.memory_space<vmem>>, vector<8x4xf32>
    tpu.vector_store %arg6[%c0_11, %c0_12], %12 {strides = array<i32>} : memref<8x4xf32, #tpu.memory_space<vmem>>, vector<8x4xf32>,
    return
  }
  func.func @transform_0(%arg0: i32) -> (i32, i32) {
    %c0_i32 = arith.constant 0 : i32
    %c0_i32_0 = arith.constant 0 : i32
    return %arg0, %c0_i32 : i32, i32
  }
  func.func @transform_1(%arg0: i32) -> (i32, i32) {
    %c0_i32 = arith.constant 0 : i32
    %c0_i32_0 = arith.constant 0 : i32
    %c0_i32_1 = arith.constant 0 : i32
    return %c0_i32, %c0_i32_0 : i32, i32
  }
  func.func @transform_2(%arg0: i32) -> (i32, i32) {
    %c0_i32 = arith.constant 0 : i32
    %c0_i32_0 = arith.constant 0 : i32
    %c0_i32_1 = arith.constant 0 : i32
    return %c0_i32, %c0_i32_0 : i32, i32
  }
  func.func @transform_3(%arg0: i32) -> (i32, i32) {
    %c0_i32 = arith.constant 0 : i32
    %c0_i32_0 = arith.constant 0 : i32
    %c0_i32_1 = arith.constant 0 : i32
    return %c0_i32, %c0_i32_0 : i32, i32
  }
  func.func @transform_4(%arg0: i32) -> (i32, i32) {
    %c0_i32 = arith.constant 0 : i32
    %c0_i32_0 = arith.constant 0 : i32
    %c0_i32_1 = arith.constant 0 : i32
    return %c0_i32, %c0_i32_0 : i32, i32
  }
  func.func @transform_5(%arg0: i32) -> (i32, i32) {
    %c0_i32 = arith.constant 0 : i32
    %c0_i32_0 = arith.constant 0 : i32
    return %arg0, %c0_i32 : i32, i32
  }
}

</mosaic_0001>

<llo_original>
// kernel: deep_q_forward_pallas.1
$region0: #{deep_q_forward_pallas.1}
  #allocation0 [shape = 'u32[]', space=smem, size = 0x4, offset = 0x4, fixed_abs, tag = 'smem constant byte address 0x4 - core index']
  #allocation1 [shape = 'u32[144,128]{1,0:T(1,128)}', space=vmem, size = 0x12000, scoped, tag = 'internal scratch']
  %s0 = inlined_call_operand.vmem [shape: f32[8,25], index: 0, kind: input, shape index: {}]
  %s1 = inlined_call_operand.vmem [shape: f32[25,128], index: 1, kind: input, shape index: {}]
  %s2 = inlined_call_operand.vmem [shape: f32[1,128], index: 2, kind: input, shape index: {}]
  %s3 = inlined_call_operand.vmem [shape: f32[128,4], index: 3, kind: input, shape index: {}]
  %s4 = inlined_call_operand.vmem [shape: f32[1,4], index: 4, kind: input, shape index: {}]
  %s5 = inlined_call_operand.vmem [shape: f32[8,4], index: 5, kind: output, shape index: {}]
  %s6 = sld [smem:[#allocation0]]
  $region30: #{deep_q_forward_pallas.1} parent=0
    _
  %s8 = ssub.s32 1, %s6
  %s9 = scalar_select 0, %s8, %s6
  // Predicated region
  $region2: #{deep_q_forward_pallas.1} parent=0 // pred_check
    _
  $region3: #{deep_q_forward_pallas.1} parent=0 // pred_check_branch
    %11 = sbr.rel (0) target = $region5
  $region4: #{deep_q_forward_pallas.1} parent=0 // pred_region
    _
  $region5: #{deep_q_forward_pallas.1} parent=0 // pred_fallthru
    _
  // Predicated region
  $region6: #{deep_q_forward_pallas.1} parent=0 // pred_check
    _
  $region7: #{deep_q_forward_pallas.1} parent=0 // pred_check_branch
    %13 = sbr.rel (0) target = $region9
  $region8: #{deep_q_forward_pallas.1} parent=0 // pred_region
    _
  $region9: #{deep_q_forward_pallas.1} parent=0 // pred_fallthru
    _
  // Predicated region
  $region10: #{deep_q_forward_pallas.1} parent=0 // pred_check
    _
  $region11: #{deep_q_forward_pallas.1} parent=0 // pred_check_branch
    %15 = sbr.rel (0) target = $region13
  $region12: #{deep_q_forward_pallas.1} parent=0 // pred_region
    _
  $region13: #{deep_q_forward_pallas.1} parent=0 // pred_fallthru
    _
  // Predicated region
  $region14: #{deep_q_forward_pallas.1} parent=0 // pred_check
    _
  $region15: #{deep_q_forward_pallas.1} parent=0 // pred_check_branch
    %17 = sbr.rel (0) target = $region17
  $region16: #{deep_q_forward_pallas.1} parent=0 // pred_region
    _
  $region17: #{deep_q_forward_pallas.1} parent=0 // pred_fallthru
    _
  // Predicated region
  $region18: #{deep_q_forward_pallas.1} parent=0 // pred_check
    _
  $region19: #{deep_q_forward_pallas.1} parent=0 // pred_check_branch
    %19 = sbr.rel (0) target = $region21
  $region20: #{deep_q_forward_pallas.1} parent=0 // pred_region
    _
  $region21: #{deep_q_forward_pallas.1} parent=0 // pred_fallthru
    _
  %v20 = vld [vmem:[%s0] sm:$0xff]
  %v21 = vld [vmem:[%s1] sm:$0xff]
  %v22 = vld [vmem:[%s1 + $0x8] sm:$0xff]
  %v23 = vld [vmem:[%s1 + $0x10] sm:$0xff]
  %v24 = vld [vmem:[%s1 + $0x18] sm:$0x1]
  %v25 = vld [vmem:[%s2] sm:$0x1]
  %v27 = vlaneseq
  %v28 = vshrl.u32 %v27, 7
  %v29 = vsub.s32 0, %v28
  %v30 = vrot.slane %v25, %v29
  %vm32 = vcmask 203776
  %v34 = vsel %vm32, %v20, 0
  %vm36 = vcmask 1040384
  %v38 = vsel %vm36, %v24, 0
  %40 = vmatprep.subr.mxu0 0.0
  %v41 = vand.u32 %v21, 4294901760
  %42 = vmatpush1.msra.mxu0 %v41
  %43 = vmatprep.subr.mxu0 0.0
  %v44 = vand.u32 %v22, 4294901760
  %45 = vmatpush1.msra.mxu0 %v44
  %46 = vmatprep.subr.mxu0 0.0
  %v47 = vand.u32 %v23, 4294901760
  %48 = vmatpush1.msra.mxu0 %v47
  %49 = vmatprep.subr.mxu0 0.0
  %v50 = vand.u32 %v38, 4294901760
  %51 = vmatpush1.msra.mxu0 %v50
  %52 = vmatprep.subr.mxu0 0.0
  %53 = vmatpush1.msra.mxu0 0.0
  %54 = vmatprep.subr.mxu0 0.0
  %55 = vmatpush1.msra.mxu0 0.0
  %56 = vmatprep.subr.mxu0 0.0
  %57 = vmatpush1.msra.mxu0 0.0
  %58 = vmatprep.subr.mxu0 0.0
  %59 = vmatpush1.msra.mxu0 0.0
  %60 = vmatprep.subr.mxu0 0.0
  %61 = vmatpush1.msra.mxu0 0.0
  %62 = vmatprep.subr.mxu0 0.0
  %63 = vmatpush1.msra.mxu0 0.0
  %64 = vmatprep.subr.mxu0 0.0
  %65 = vmatpush1.msra.mxu0 0.0
  %66 = vmatprep.subr.mxu0 0.0
  %67 = vmatpush1.msra.mxu0 0.0
  %68 = vmatprep.subr.mxu0 0.0
  %69 = vmatpush1.msra.mxu0 0.0
  %70 = vmatprep.subr.mxu0 0.0
  %71 = vmatpush1.msra.mxu0 0.0
  %72 = vmatprep.subr.mxu0 0.0
  %73 = vmatpush1.msra.mxu0 0.0
  %74 = vmatprep.subr.mxu0 0.0
  %75 = vmatpush1.msra.mxu0 0.0
  %76 = vmatprep.subr.mxu0 0.0
  %77 = vmatpush1.msra.mxu0 0.0
  %78 = vmatprep.subr.mxu0 0.0
  %79 = vmatpush1.msra.mxu0 0.0
  %80 = vmatprep.subr.mxu0 0.0
  %81 = vmatpush1.msra.mxu0 0.0
  %82 = vmatprep.subr.mxu0 0.0
  %83 = vmatpush1.msra.mxu0 0.0
  %84 = vmatprep.subr.mxu0 0.0
  %85 = vmatpush1.msra.mxu0 0.0
  %86 = vmatprep.subr.mxu0 0.0
  %87 = vmatpush1.msra.mxu0 0.0
  %88 = vmatprep.subr.mxu0 0.0
  %89 = vmatpush1.msra.mxu0 0.0
  %90 = vmatprep.subr.mxu0 0.0
  %91 = vmatpush1.msra.mxu0 0.0
  %92 = vmatprep.subr.mxu0 0.0
  %93 = vmatpush1.msra.mxu0 0.0
  %94 = vmatprep.subr.mxu0 0.0
  %95 = vmatpush1.msra.mxu0 0.0
  %96 = vmatprep.subr.mxu0 0.0
  %97 = vmatpush1.msra.mxu0 0.0
  %98 = vmatprep.subr.mxu0 0.0
  %99 = vmatpush1.msra.mxu0 0.0
  %100 = vmatprep.subr.mxu0 0.0
  %101 = vmatpush1.msra.mxu0 0.0
  %102 = vmatprep.subr.mxu0 0.0
  %103 = vmatpush1.msra.mxu0 0.0
  %104 = vmatprep.subr.mxu0 0.0
  %105 = vmatpush1.msra.mxu0 0.0
  %106 = vmatprep.subr.mxu0 0.0
  %107 = vmatpush1.msra.mxu0 0.0
  %108 = vmatprep.mubr.f32.mxu0 0.0
  %v109 = vand.u32 %v34, 4294901760
  %v110 = vsub.f32 %v34, %v109
  %v111 = vand.u32 %v110, 4294901760
  %v112 = vsub.f32 %v110, %v111
  %v113 = vand.u32 %v112, 4294901760
  %114 = vmatmul.mubr.f32.gmra.mrb[0].mxu0 %v113
  %v115 = vpop.f32.mrb[0].mxu0
  %v116 = vadd.f32 %v30, %v115
  %v117 = vpop.f32.mrb[0].mxu0
  %118 = vdwg.mxu0
  %119 = vmatprep.subr.mxu0 0.0
  %v120 = vand.u32 %v21, 4294901760
  %v121 = vsub.f32 %v21, %v120
  %v122 = vand.u32 %v121, 4294901760
  %v123 = vsub.f32 %v121, %v122
  %v124 = vand.u32 %v123, 4294901760
  %125 = vmatpush1.msra.mxu0 %v124
  %126 = vmatprep.subr.mxu0 0.0
  %v127 = vand.u32 %v22, 4294901760
  %v128 = vsub.f32 %v22, %v127
  %v129 = vand.u32 %v128, 4294901760
  %v130 = vsub.f32 %v128, %v129
  %v131 = vand.u32 %v130, 4294901760
  %132 = vmatpush1.msra.mxu0 %v131
  %133 = vmatprep.subr.mxu0 0.0
  %v134 = vand.u32 %v23, 4294901760
  %v135 = vsub.f32 %v23, %v134
  %v136 = vand.u32 %v135, 4294901760
  %v137 = vsub.f32 %v135, %v136
  %v138 = vand.u32 %v137, 4294901760
  %139 = vmatpush1.msra.mxu0 %v138
  %140 = vmatprep.subr.mxu0 0.0
  %v141 = vand.u32 %v38, 4294901760
  %v142 = vsub.f32 %v38, %v141
  %v143 = vand.u32 %v142, 4294901760
  %v144 = vsub.f32 %v142, %v143
  %v145 = vand.u32 %v144, 4294901760
  %146 = vmatpush1.msra.mxu0 %v145
  %147 = vmatprep.subr.mxu0 0.0
  %148 = vmatpush1.msra.mxu0 0.0
  %149 = vmatprep.subr.mxu0 0.0
  %150 = vmatpush1.msra.mxu0 0.0
  %151 = vmatprep.subr.mxu0 0.0
  %152 = vmatpush1.msra.mxu0 0.0
  %153 = vmatprep.subr.mxu0 0.0
  %154 = vmatpush1.msra.mxu0 0.0
  %155 = vmatprep.subr.mxu0 0.0
  %156 = vmatpush1.msra.mxu0 0.0
  %157 = vmatprep.subr.mxu0 0.0
  %158 = vmatpush1.msra.mxu0 0.0
  %159 = vmatprep.subr.mxu0 0.0
  %160 = vmatpush1.msra.mxu0 0.0
  %161 = vmatprep.subr.mxu0 0.0
  %162 = vmatpush1.msra.mxu0 0.0
  %163 = vmatprep.subr.mxu0 0.0
  %164 = vmatpush1.msra.mxu0 0.0
  %165 = vmatprep.subr.mxu0 0.0
  %166 = vmatpush1.msra.mxu0 0.0
  %167 = vmatprep.subr.mxu0 0.0
  %168 = vmatpush1.msra.mxu0 0.0
  %169 = vmatprep.subr.mxu0 0.0
  %170 = vmatpush1.msra.mxu0 0.0
  %171 = vmatprep.subr.mxu0 0.0
  %172 = vmatpush1.msra.mxu0 0.0
  %173 = vmatprep.subr.mxu0 0.0
  %174 = vmatpush1.msra.mxu0 0.0
  %175 = vmatprep.subr.mxu0 0.0
  %176 = vmatpush1.msra.mxu0 0.0
  %177 = vmatprep.subr.mxu0 0.0
  %178 = vmatpush1.msra.mxu0 0.0
  %179 = vmatprep.subr.mxu0 0.0
  %180 = vmatpush1.msra.mxu0 0.0
  %181 = vmatprep.subr.mxu0 0.0
  %182 = vmatpush1.msra.mxu0 0.0
  %183 = vmatprep.subr.mxu0 0.0
  %184 = vmatpush1.msra.mxu0 0.0
  %185 = vmatprep.subr.mxu0 0.0
  %186 = vmatpush1.msra.mxu0 0.0
  %187 = vmatprep.subr.mxu0 0.0
  %188 = vmatpush1.msra.mxu0 0.0
  %189 = vmatprep.subr.mxu0 0.0
  %190 = vmatpush1.msra.mxu0 0.0
  %191 = vmatprep.subr.mxu0 0.0
  %192 = vmatpush1.msra.mxu0 0.0
  %193 = vmatprep.subr.mxu0 0.0
  %194 = vmatpush1.msra.mxu0 0.0
  %195 = vmatprep.subr.mxu0 0.0
  %196 = vmatpush1.msra.mxu0 0.0
  %197 = vmatprep.subr.mxu0 0.0
  %198 = vmatpush1.msra.mxu0 0.0
  %199 = vmatprep.subr.mxu0 0.0
  %200 = vmatpush1.msra.mxu0 0.0
  %201 = vmatprep.subr.mxu0 0.0
  %202 = vmatpush1.msra.mxu0 0.0
  %203 = vmatprep.mubr.f32.mxu0 0.0
  %v204 = vand.u32 %v34, 4294901760
  %205 = vmatmul.mubr.f32.gmra.mrb[0].mxu0 %v204
  %v206 = vpop.f32.mrb[0].mxu0
  %v207 = vadd.f32 %v116, %v206
  %v208 = vpop.f32.mrb[0].mxu0
  %209 = vdwg.mxu0
  %210 = vmatprep.subr.mxu0 0.0
  %v211 = vand.u32 %v21, 4294901760
  %v212 = vsub.f32 %v21, %v211
  %213 = vmatpush1.msra.mxu0 %v212
  %214 = vmatprep.subr.mxu0 0.0
  %v215 = vand.u32 %v22, 4294901760
  %v216 = vsub.f32 %v22, %v215
  %217 = vmatpush1.msra.mxu0 %v216
  %218 = vmatprep.subr.mxu0 0.0
  %v219 = vand.u32 %v23, 4294901760
  %v220 = vsub.f32 %v23, %v219
  %221 = vmatpush1.msra.mxu0 %v220
  %222 = vmatprep.subr.mxu0 0.0
  %v223 = vand.u32 %v38, 4294901760
  %v224 = vsub.f32 %v38, %v223
  %225 = vmatpush1.msra.mxu0 %v224
  %226 = vmatprep.subr.mxu0 0.0
  %227 = vmatpush1.msra.mxu0 0.0
  %228 = vmatprep.subr.mxu0 0.0
  %229 = vmatpush1.msra.mxu0 0.0
  %230 = vmatprep.subr.mxu0 0.0
  %231 = vmatpush1.msra.mxu0 0.0
  %232 = vmatprep.subr.mxu0 0.0
  %233 = vmatpush1.msra.mxu0 0.0
  %234 = vmatprep.subr.mxu0 0.0
  %235 = vmatpush1.msra.mxu0 0.0
  %236 = vmatprep.subr.mxu0 0.0
  %237 = vmatpush1.msra.mxu0 0.0
  %238 = vmatprep.subr.mxu0 0.0
  %239 = vmatpush1.msra.mxu0 0.0
  %240 = vmatprep.subr.mxu0 0.0
  %241 = vmatpush1.msra.mxu0 0.0
  %242 = vmatprep.subr.mxu0 0.0
  %243 = vmatpush1.msra.mxu0 0.0
  %244 = vmatprep.subr.mxu0 0.0
  %245 = vmatpush1.msra.mxu0 0.0
  %246 = vmatprep.subr.mxu0 0.0
  %247 = vmatpush1.msra.mxu0 0.0
  %248 = vmatprep.subr.mxu0 0.0
  %249 = vmatpush1.msra.mxu0 0.0
  %250 = vmatprep.subr.mxu0 0.0
  %251 = vmatpush1.msra.mxu0 0.0
  %252 = vmatprep.subr.mxu0 0.0
  %253 = vmatpush1.msra.mxu0 0.0
  %254 = vmatprep.subr.mxu0 0.0
  %255 = vmatpush1.msra.mxu0 0.0
  %256 = vmatprep.subr.mxu0 0.0
  %257 = vmatpush1.msra.mxu0 0.0
  %258 = vmatprep.subr.mxu0 0.0
  %259 = vmatpush1.msra.mxu0 0.0
  %260 = vmatprep.subr.mxu0 0.0
  %261 = vmatpush1.msra.mxu0 0.0
  %262 = vmatprep.subr.mxu0 0.0
  %263 = vmatpush1.msra.mxu0 0.0
  %264 = vmatprep.subr.mxu0 0.0
  %265 = vmatpush1.msra.mxu0 0.0
  %266 = vmatprep.subr.mxu0 0.0
  %267 = vmatpush1.msra.mxu0 0.0
  %268 = vmatprep.subr.mxu0 0.0
  %269 = vmatpush1.msra.mxu0 0.0
  %270 = vmatprep.subr.mxu0 0.0
  %271 = vmatpush1.msra.mxu0 0.0
  %272 = vmatprep.subr.mxu0 0.0
  %273 = vmatpush1.msra.mxu0 0.0
  %274 = vmatprep.subr.mxu0 0.0
  %275 = vmatpush1.msra.mxu0 0.0
  %276 = vmatprep.subr.mxu0 0.0
  %277 = vmatpush1.msra.mxu0 0.0
  %278 = vmatprep.subr.mxu0 0.0
  %279 = vmatpush1.msra.mxu0 0.0
  %280 = vmatprep.subr.mxu0 0.0
  %281 = vmatpush1.msra.mxu0 0.0
  %282 = vmatprep.mubr.f32.mxu0 0.0
  %v283 = vand.u32 %v34, 4294901760
  %v284 = vsub.f32 %v34, %v283
  %285 = vmatmul.mubr.f32.gmra.mrb[0].mxu0 %v284
  %v286 = vpop.f32.mrb[0].mxu0
  %v287 = vadd.f32 %v207, %v286
  %v288 = vpop.f32.mrb[0].mxu0
  %289 = vdwg.mxu0
  %290 = vmatprep.subr.mxu0 0.0
  %v291 = vand.u32 %v21, 4294901760
  %292 = vmatpush1.msra.mxu0 %v291
  %293 = vmatprep.subr.mxu0 0.0
  %v294 = vand.u32 %v22, 4294901760
  %295 = vmatpush1.msra.mxu0 %v294
  %296 = vmatprep.subr.mxu0 0.0
  %v297 = vand.u32 %v23, 4294901760
  %298 = vmatpush1.msra.mxu0 %v297
  %299 = vmatprep.subr.mxu0 0.0
  %v300 = vand.u32 %v38, 4294901760
  %301 = vmatpush1.msra.mxu0 %v300
  %302 = vmatprep.subr.mxu0 0.0
  %303 = vmatpush1.msra.mxu0 0.0
  %304 = vmatprep.subr.mxu0 0.0
  %305 = vmatpush1.msra.mxu0 0.0
  %306 = vmatprep.subr.mxu0 0.0
  %307 = vmatpush1.msra.mxu0 0.0
  %308 = vmatprep.subr.mxu0 0.0
  %309 = vmatpush1.msra.mxu0 0.0
  %310 = vmatprep.subr.mxu0 0.0
  %311 = vmatpush1.msra.mxu0 0.0
  %312 = vmatprep.subr.mxu0 0.0
  %313 = vmatpush1.msra.mxu0 0.0
  %314 = vmatprep.subr.mxu0 0.0
  %315 = vmatpush1.msra.mxu0 0.0
  %316 = vmatprep.subr.mxu0 0.0
  %317 = vmatpush1.msra.mxu0 0.0
  %318 = vmatprep.subr.mxu0 0.0
  %319 = vmatpush1.msra.mxu0 0.0
  %320 = vmatprep.subr.mxu0 0.0
  %321 = vmatpush1.msra.mxu0 0.0
  %322 = vmatprep.subr.mxu0 0.0
  %323 = vmatpush1.msra.mxu0 0.0
  %324 = vmatprep.subr.mxu0 0.0
  %325 = vmatpush1.msra.mxu0 0.0
  %326 = vmatprep.subr.mxu0 0.0
  %327 = vmatpush1.msra.mxu0 0.0
  %328 = vmatprep.subr.mxu0 0.0
  %329 = vmatpush1.msra.mxu0 0.0
  %330 = vmatprep.subr.mxu0 0.0
  %331 = vmatpush1.msra.mxu0 0.0
  %332 = vmatprep.subr.mxu0 0.0
  %333 = vmatpush1.msra.mxu0 0.0
  %334 = vmatprep.subr.mxu0 0.0
  %335 = vmatpush1.msra.mxu0 0.0
  %336 = vmatprep.subr.mxu0 0.0
  %337 = vmatpush1.msra.mxu0 0.0
  %338 = vmatprep.subr.mxu0 0.0
  %339 = vmatpush1.msra.mxu0 0.0
  %340 = vmatprep.subr.mxu0 0.0
  %341 = vmatpush1.msra.mxu0 0.0
  %342 = vmatprep.subr.mxu0 0.0
  %343 = vmatpush1.msra.mxu0 0.0
  %344 = vmatprep.subr.mxu0 0.0
  %345 = vmatpush1.msra.mxu0 0.0
  %346 = vmatprep.subr.mxu0 0.0
  %347 = vmatpush1.msra.mxu0 0.0
  %348 = vmatprep.subr.mxu0 0.0
  %349 = vmatpush1.msra.mxu0 0.0
  %350 = vmatprep.subr.mxu0 0.0
  %351 = vmatpush1.msra.mxu0 0.0
  %352 = vmatprep.subr.mxu0 0.0
  %353 = vmatpush1.msra.mxu0 0.0
  %354 = vmatprep.subr.mxu0 0.0
  %355 = vmatpush1.msra.mxu0 0.0
  %356 = vmatprep.subr.mxu0 0.0
  %357 = vmatpush1.msra.mxu0 0.0
  %358 = vmatprep.mubr.f32.mxu0 0.0
  %v359 = vand.u32 %v34, 4294901760
  %v360 = vsub.f32 %v34, %v359
  %v361 = vand.u32 %v360, 4294901760
  %362 = vmatmul.mubr.f32.gmra.mrb[0].mxu0 %v361
  %v363 = vpop.f32.mrb[0].mxu0
  %v364 = vadd.f32 %v287, %v363
  %v365 = vpop.f32.mrb[0].mxu0
  %366 = vdwg.mxu0
  %367 = vmatprep.subr.mxu0 0.0
  %v368 = vand.u32 %v21, 4294901760
  %v369 = vsub.f32 %v21, %v368
  %v370 = vand.u32 %v369, 4294901760
  %371 = vmatpush1.msra.mxu0 %v370
  %372 = vmatprep.subr.mxu0 0.0
  %v373 = vand.u32 %v22, 4294901760
  %v374 = vsub.f32 %v22, %v373
  %v375 = vand.u32 %v374, 4294901760
  %376 = vmatpush1.msra.mxu0 %v375
  %377 = vmatprep.subr.mxu0 0.0
  %v378 = vand.u32 %v23, 4294901760
  %v379 = vsub.f32 %v23, %v378
  %v380 = vand.u32 %v379, 4294901760
  %381 = vmatpush1.msra.mxu0 %v380
  %382 = vmatprep.subr.mxu0 0.0
  %v383 = vand.u32 %v38, 4294901760
  %v384 = vsub.f32 %v38, %v383
  %v385 = vand.u32 %v384, 4294901760
  %386 = vmatpush1.msra.mxu0 %v385
  %387 = vmatprep.subr.mxu0 0.0
  %388 = vmatpush1.msra.mxu0 0.0
  %389 = vmatprep.subr.mxu0 0.0
  %390 = vmatpush1.msra.mxu0 0.0
  %391 = vmatprep.subr.mxu0 0.0
  %392 = vmatpush1.msra.mxu0 0.0
  %393 = vmatprep.subr.mxu0 0.0
  %394 = vmatpush1.msra.mxu0 0.0
  %395 = vmatprep.subr.mxu0 0.0
  %396 = vmatpush1.msra.mxu0 0.0
  %397 = vmatprep.subr.mxu0 0.0
  %398 = vmatpush1.msra.mxu0 0.0
  %399 = vmatprep.subr.mxu0 0.0
  %400 = vmatpush1.msra.mxu0 0.0
  %401 = vmatprep.subr.mxu0 0.0
  %402 = vmatpush1.msra.mxu0 0.0
  %403 = vmatprep.subr.mxu0 0.0
  %404 = vmatpush1.msra.mxu0 0.0
  %405 = vmatprep.subr.mxu0 0.0
  %406 = vmatpush1.msra.mxu0 0.0
  %407 = vmatprep.subr.mxu0 0.0
  %408 = vmatpush1.msra.mxu0 0.0
  %409 = vmatprep.subr.mxu0 0.0
  %410 = vmatpush1.msra.mxu0 0.0
  %411 = vmatprep.subr.mxu0 0.0
  %412 = vmatpush1.msra.mxu0 0.0
  %413 = vmatprep.subr.mxu0 0.0
  %414 = vmatpush1.msra.mxu0 0.0
  %415 = vmatprep.subr.mxu0 0.0
  %416 = vmatpush1.msra.mxu0 0.0
  %417 = vmatprep.subr.mxu0 0.0
  %418 = vmatpush1.msra.mxu0 0.0
  %419 = vmatprep.subr.mxu0 0.0
  %420 = vmatpush1.msra.mxu0 0.0
  %421 = vmatprep.subr.mxu0 0.0
  %422 = vmatpush1.msra.mxu0 0.0
  %423 = vmatprep.subr.mxu0 0.0
  %424 = vmatpush1.msra.mxu0 0.0
  %425 = vmatprep.subr.mxu0 0.0
  %426 = vmatpush1.msra.mxu0 0.0
  %427 = vmatprep.subr.mxu0 0.0
  %428 = vmatpush1.msra.mxu0 0.0
  %429 = vmatprep.subr.mxu0 0.0
  %430 = vmatpush1.msra.mxu0 0.0
  %431 = vmatprep.subr.mxu0 0.0
  %432 = vmatpush1.msra.mxu0 0.0
  %433 = vmatprep.subr.mxu0 0.0
  %434 = vmatpush1.msra.mxu0 0.0
  %435 = vmatprep.subr.mxu0 0.0
  %436 = vmatpush1.msra.mxu0 0.0
  %437 = vmatprep.subr.mxu0 0.0
  %438 = vmatpush1.msra.mxu0 0.0
  %439 = vmatprep.subr.mxu0 0.0
  %440 = vmatpush1.msra.mxu0 0.0
  %441 = vmatprep.subr.mxu0 0.0
  %442 = vmatpush1.msra.mxu0 0.0
  %443 = vmatprep.mubr.f32.mxu0 0.0
  %v444 = vand.u32 %v34, 4294901760
  %445 = vmatmul.mubr.f32.gmra.mrb[0].mxu0 %v444
  %v446 = vpop.f32.mrb[0].mxu0
  %v447 = vadd.f32 %v364, %v446
  %v448 = vpop.f32.mrb[0].mxu0
  %449 = vdwg.mxu0
  %450 = vmatprep.subr.mxu0 0.0
  %v451 = vand.u32 %v21, 4294901760
  %452 = vmatpush1.msra.mxu0 %v451
  %453 = vmatprep.subr.mxu0 0.0
  %v454 = vand.u32 %v22, 4294901760
  %455 = vmatpush1.msra.mxu0 %v454
  %456 = vmatprep.subr.mxu0 0.0
  %v457 = vand.u32 %v23, 4294901760
  %458 = vmatpush1.msra.mxu0 %v457
  %459 = vmatprep.subr.mxu0 0.0
  %v460 = vand.u32 %v38, 4294901760
  %461 = vmatpush1.msra.mxu0 %v460
  %462 = vmatprep.subr.mxu0 0.0
  %463 = vmatpush1.msra.mxu0 0.0
  %464 = vmatprep.subr.mxu0 0.0
  %465 = vmatpush1.msra.mxu0 0.0
  %466 = vmatprep.subr.mxu0 0.0
  %467 = vmatpush1.msra.mxu0 0.0
  %468 = vmatprep.subr.mxu0 0.0
  %469 = vmatpush1.msra.mxu0 0.0
  %470 = vmatprep.subr.mxu0 0.0
  %471 = vmatpush1.msra.mxu0 0.0
  %472 = vmatprep.subr.mxu0 0.0
  %473 = vmatpush1.msra.mxu0 0.0
  %474 = vmatprep.subr.mxu0 0.0
  %475 = vmatpush1.msra.mxu0 0.0
  %476 = vmatprep.subr.mxu0 0.0
  %477 = vmatpush1.msra.mxu0 0.0
  %478 = vmatprep.subr.mxu0 0.0
  %479 = vmatpush1.msra.mxu0 0.0
  %480 = vmatprep.subr.mxu0 0.0
  %481 = vmatpush1.msra.mxu0 0.0
  %482 = vmatprep.subr.mxu0 0.0
  %483 = vmatpush1.msra.mxu0 0.0
  %484 = vmatprep.subr.mxu0 0.0
  %485 = vmatpush1.msra.mxu0 0.0
  %486 = vmatprep.subr.mxu0 0.0
  %487 = vmatpush1.msra.mxu0 0.0
  %488 = vmatprep.subr.mxu0 0.0
  %489 = vmatpush1.msra.mxu0 0.0
  %490 = vmatprep.subr.mxu0 0.0
  %491 = vmatpush1.msra.mxu0 0.0
  %492 = vmatprep.subr.mxu0 0.0
  %493 = vmatpush1.msra.mxu0 0.0
  %494 = vmatprep.subr.mxu0 0.0
  %495 = vmatpush1.msra.mxu0 0.0
  %496 = vmatprep.subr.mxu0 0.0
  %497 = vmatpush1.msra.mxu0 0.0
  %498 = vmatprep.subr.mxu0 0.0
  %499 = vmatpush1.msra.mxu0 0.0
  %500 = vmatprep.subr.mxu0 0.0
  %501 = vmatpush1.msra.mxu0 0.0
  %502 = vmatprep.subr.mxu0 0.0
  %503 = vmatpush1.msra.mxu0 0.0
  %504 = vmatprep.subr.mxu0 0.0
  %505 = vmatpush1.msra.mxu0 0.0
  %506 = vmatprep.subr.mxu0 0.0
  %507 = vmatpush1.msra.mxu0 0.0
  %508 = vmatprep.subr.mxu0 0.0
  %509 = vmatpush1.msra.mxu0 0.0
  %510 = vmatprep.subr.mxu0 0.0
  %511 = vmatpush1.msra.mxu0 0.0
  %512 = vmatprep.subr.mxu0 0.0
  %513 = vmatpush1.msra.mxu0 0.0
  %514 = vmatprep.subr.mxu0 0.0
  %515 = vmatpush1.msra.mxu0 0.0
  %516 = vmatprep.subr.mxu0 0.0
  %517 = vmatpush1.msra.mxu0 0.0
  %518 = vmatprep.mubr.f32.mxu0 0.0
  %v519 = vand.u32 %v34, 4294901760
  %520 = vmatmul.mubr.f32.gmra.mrb[0].mxu0 %v519
  %v521 = vpop.f32.mrb[0].mxu0
  %v522 = vadd.f32 %v447, %v521
  %v523 = vpop.f32.mrb[0].mxu0
  %524 = vdwg.mxu0
  %v525 = vmax.f32 %v522, 0.0
  %v526 = vld [vmem:[%s3] sm:$0xff]
  %v527 = vld [vmem:[%s3 + $0x8] sm:$0xff]
  %v528 = vld [vmem:[%s3 + $0x10] sm:$0xff]
  %v529 = vld [vmem:[%s3 + $0x18] sm:$0xff]
  %v530 = vld [vmem:[%s3 + $0x20] sm:$0xff]
  %v531 = vld [vmem:[%s3 + $0x28] sm:$0xff]
  %v532 = vld [vmem:[%s3 + $0x30] sm:$0xff]
  %v533 = vld [vmem:[%s3 + $0x38] sm:$0xff]
  %v534 = vld [vmem:[%s3 + $0x40] sm:$0xff]
  %v535 = vld [vmem:[%s3 + $0x48] sm:$0xff]
  %v536 = vld [vmem:[%s3 + $0x50] sm:$0xff]
  %v537 = vld [vmem:[%s3 + $0x58] sm:$0xff]
  %v538 = vld [vmem:[%s3 + $0x60] sm:$0xff]
  %v539 = vld [vmem:[%s3 + $0x68] sm:$0xff]
  %v540 = vld [vmem:[%s3 + $0x70] sm:$0xff]
  %v541 = vld [vmem:[%s3 + $0x78] sm:$0xff]
  %v542 = vld [vmem:[%s4] sm:$0x1]
  %v544 = vlaneseq
  %v545 = vshrl.u32 %v544, 7
  %v546 = vsub.s32 0, %v545
  %v547 = vrot.slane %v542, %v546
  %549 = vmatprep.subr.mxu0 0.0
  %v550 = vand.u32 %v526, 4294901760
  %551 = vmatpush1.msra.mxu0 %v550
  %552 = vmatprep.subr.mxu0 0.0
  %v553 = vand.u32 %v527, 4294901760
  %554 = vmatpush1.msra.mxu0 %v553
  %555 = vmatprep.subr.mxu0 0.0
  %v556 = vand.u32 %v528, 4294901760
  %557 = vmatpush1.msra.mxu0 %v556
  %558 = vmatprep.subr.mxu0 0.0
  %v559 = vand.u32 %v529, 4294901760
  %560 = vmatpush1.msra.mxu0 %v559
  %561 = vmatprep.subr.mxu0 0.0
  %v562 = vand.u32 %v530, 4294901760
  %563 = vmatpush1.msra.mxu0 %v562
  %564 = vmatprep.subr.mxu0 0.0
  %v565 = vand.u32 %v531, 4294901760
  %566 = vmatpush1.msra.mxu0 %v565
  %567 = vmatprep.subr.mxu0 0.0
  %v568 = vand.u32 %v532, 4294901760
  %569 = vmatpush1.msra.mxu0 %v568
  %570 = vmatprep.subr.mxu0 0.0
  %v571 = vand.u32 %v533, 4294901760
  %572 = vmatpush1.msra.mxu0 %v571
  %573 = vmatprep.subr.mxu0 0.0
  %v574 = vand.u32 %v534, 4294901760
  %575 = vmatpush1.msra.mxu0 %v574
  %576 = vmatprep.subr.mxu0 0.0
  %v577 = vand.u32 %v535, 4294901760
  %578 = vmatpush1.msra.mxu0 %v577
  %579 = vmatprep.subr.mxu0 0.0
  %v580 = vand.u32 %v536, 4294901760
  %581 = vmatpush1.msra.mxu0 %v580
  %582 = vmatprep.subr.mxu0 0.0
  %v583 = vand.u32 %v537, 4294901760
  %584 = vmatpush1.msra.mxu0 %v583
  %585 = vmatprep.subr.mxu0 0.0
  %v586 = vand.u32 %v538, 4294901760
  %587 = vmatpush1.msra.mxu0 %v586
  %588 = vmatprep.subr.mxu0 0.0
  %v589 = vand.u32 %v539, 4294901760
  %590 = vmatpush1.msra.mxu0 %v589
  %591 = vmatprep.subr.mxu0 0.0
  %v592 = vand.u32 %v540, 4294901760
  %593 = vmatpush1.msra.mxu0 %v592
  %594 = vmatprep.subr.mxu0 0.0
  %v595 = vand.u32 %v541, 4294901760
  %596 = vmatpush1.msra.mxu0 %v595
  %597 = vmatprep.subr.mxu0 0.0
  %598 = vmatpush1.msra.mxu0 0.0
  %599 = vmatprep.subr.mxu0 0.0
  %600 = vmatpush1.msra.mxu0 0.0
  %601 = vmatprep.subr.mxu0 0.0
  %602 = vmatpush1.msra.mxu0 0.0
  %603 = vmatprep.subr.mxu0 0.0
  %604 = vmatpush1.msra.mxu0 0.0
  %605 = vmatprep.subr.mxu0 0.0
  %606 = vmatpush1.msra.mxu0 0.0
  %607 = vmatprep.subr.mxu0 0.0
  %608 = vmatpush1.msra.mxu0 0.0
  %609 = vmatprep.subr.mxu0 0.0
  %610 = vmatpush1.msra.mxu0 0.0
  %611 = vmatprep.subr.mxu0 0.0
  %612 = vmatpush1.msra.mxu0 0.0
  %613 = vmatprep.subr.mxu0 0.0
  %614 = vmatpush1.msra.mxu0 0.0
  %615 = vmatprep.subr.mxu0 0.0
  %616 = vmatpush1.msra.mxu0 0.0
  %617 = vmatprep.subr.mxu0 0.0
  %618 = vmatpush1.msra.mxu0 0.0
  %619 = vmatprep.subr.mxu0 0.0
  %620 = vmatpush1.msra.mxu0 0.0
  %621 = vmatprep.subr.mxu0 0.0
  %622 = vmatpush1.msra.mxu0 0.0
  %623 = vmatprep.subr.mxu0 0.0
  %624 = vmatpush1.msra.mxu0 0.0
  %625 = vmatprep.subr.mxu0 0.0
  %626 = vmatpush1.msra.mxu0 0.0
  %627 = vmatprep.subr.mxu0 0.0
  %628 = vmatpush1.msra.mxu0 0.0
  %629 = vmatprep.mubr.f32.mxu0 0.0
  %v630 = vand.u32 %v525, 4294901760
  %v631 = vsub.f32 %v525, %v630
  %v632 = vand.u32 %v631, 4294901760
  %v633 = vsub.f32 %v631, %v632
  %v634 = vand.u32 %v633, 4294901760
  %635 = vmatmul.mubr.f32.gmra.mrb[0].mxu0 %v634
  %v636 = vpop.f32.mrb[0].mxu0
  %v637 = vadd.f32 %v547, %v636
  %v638 = vpop.f32.mrb[0].mxu0
  %639 = vdwg.mxu0
  %640 = vmatprep.subr.mxu0 0.0
  %v641 = vand.u32 %v526, 4294901760
  %v642 = vsub.f32 %v526, %v641
  %v643 = vand.u32 %v642, 4294901760
  %v644 = vsub.f32 %v642, %v643
  %v645 = vand.u32 %v644, 4294901760
  %646 = vmatpush1.msra.mxu0 %v645
  %647 = vmatprep.subr.mxu0 0.0
  %v648 = vand.u32 %v527, 4294901760
  %v649 = vsub.f32 %v527, %v648
  %v650 = vand.u32 %v649, 4294901760
  %v651 = vsub.f32 %v649, %v650
  %v652 = vand.u32 %v651, 4294901760
  %653 = vmatpush1.msra.mxu0 %v652
  %654 = vmatprep.subr.mxu0 0.0
  %v655 = vand.u32 %v528, 4294901760
  %v656 = vsub.f32 %v528, %v655
  %v657 = vand.u32 %v656, 4294901760
  %v658 = vsub.f32 %v656, %v657
  %v659 = vand.u32 %v658, 4294901760
  %660 = vmatpush1.msra.mxu0 %v659
  %661 = vmatprep.subr.mxu0 0.0
  %v662 = vand.u32 %v529, 4294901760
  %v663 = vsub.f32 %v529, %v662
  %v664 = vand.u32 %v663, 4294901760
  %v665 = vsub.f32 %v663, %v664
  %v666 = vand.u32 %v665, 4294901760
  %667 = vmatpush1.msra.mxu0 %v666
  %668 = vmatprep.subr.mxu0 0.0
  %v669 = vand.u32 %v530, 4294901760
  %v670 = vsub.f32 %v530, %v669
  %v671 = vand.u32 %v670, 4294901760
  %v672 = vsub.f32 %v670, %v671
  %v673 = vand.u32 %v672, 4294901760
  %674 = vmatpush1.msra.mxu0 %v673
  %675 = vmatprep.subr.mxu0 0.0
  %v676 = vand.u32 %v531, 4294901760
  %v677 = vsub.f32 %v531, %v676
  %v678 = vand.u32 %v677, 4294901760
  %v679 = vsub.f32 %v677, %v678
  %v680 = vand.u32 %v679, 4294901760
  %681 = vmatpush1.msra.mxu0 %v680
  %682 = vmatprep.subr.mxu0 0.0
  %v683 = vand.u32 %v532, 4294901760
  %v684 = vsub.f32 %v532, %v683
  %v685 = vand.u32 %v684, 4294901760
  %v686 = vsub.f32 %v684, %v685
  %v687 = vand.u32 %v686, 4294901760
  %688 = vmatpush1.msra.mxu0 %v687
  %689 = vmatprep.subr.mxu0 0.0
  %v690 = vand.u32 %v533, 4294901760
  %v691 = vsub.f32 %v533, %v690
  %v692 = vand.u32 %v691, 4294901760
  %v693 = vsub.f32 %v691, %v692
  %v694 = vand.u32 %v693, 4294901760
  %695 = vmatpush1.msra.mxu0 %v694
  %696 = vmatprep.subr.mxu0 0.0
  %v697 = vand.u32 %v534, 4294901760
  %v698 = vsub.f32 %v534, %v697
  %v699 = vand.u32 %v698, 4294901760
  %v700 = vsub.f32 %v698, %v699
  %v701 = vand.u32 %v700, 4294901760
  %702 = vmatpush1.msra.mxu0 %v701
  %703 = vmatprep.subr.mxu0 0.0
  %v704 = vand.u32 %v535, 4294901760
  %v705 = vsub.f32 %v535, %v704
  %v706 = vand.u32 %v705, 4294901760
  %v707 = vsub.f32 %v705, %v706
  %v708 = vand.u32 %v707, 4294901760
  %709 = vmatpush1.msra.mxu0 %v708
  %710 = vmatprep.subr.mxu0 0.0
  %v711 = vand.u32 %v536, 4294901760
  %v712 = vsub.f32 %v536, %v711
  %v713 = vand.u32 %v712, 4294901760
  %v714 = vsub.f32 %v712, %v713
  %v715 = vand.u32 %v714, 4294901760
  %716 = vmatpush1.msra.mxu0 %v715
  %717 = vmatprep.subr.mxu0 0.0
  %v718 = vand.u32 %v537, 4294901760
  %v719 = vsub.f32 %v537, %v718
  %v720 = vand.u32 %v719, 4294901760
  %v721 = vsub.f32 %v719, %v720
  %v722 = vand.u32 %v721, 4294901760
  %723 = vmatpush1.msra.mxu0 %v722
  %724 = vmatprep.subr.mxu0 0.0
  %v725 = vand.u32 %v538, 4294901760
  %v726 = vsub.f32 %v538, %v725
  %v727 = vand.u32 %v726, 4294901760
  %v728 = vsub.f32 %v726, %v727
  %v729 = vand.u32 %v728, 4294901760
  %730 = vmatpush1.msra.mxu0 %v729
  %731 = vmatprep.subr.mxu0 0.0
  %v732 = vand.u32 %v539, 4294901760
  %v733 = vsub.f32 %v539, %v732
  %v734 = vand.u32 %v733, 4294901760
  %v735 = vsub.f32 %v733, %v734
  %v736 = vand.u32 %v735, 4294901760
  %737 = vmatpush1.msra.mxu0 %v736
  %738 = vmatprep.subr.mxu0 0.0
  %v739 = vand.u32 %v540, 4294901760
  %v740 = vsub.f32 %v540, %v739
  %v741 = vand.u32 %v740, 4294901760
  %v742 = vsub.f32 %v740, %v741
  %v743 = vand.u32 %v742, 4294901760
  %744 = vmatpush1.msra.mxu0 %v743
  %745 = vmatprep.subr.mxu0 0.0
  %v746 = vand.u32 %v541, 4294901760
  %v747 = vsub.f32 %v541, %v746
  %v748 = vand.u32 %v747, 4294901760
  %v749 = vsub.f32 %v747, %v748
  %v750 = vand.u32 %v749, 4294901760
  %751 = vmatpush1.msra.mxu0 %v750
  %752 = vmatprep.subr.mxu0 0.0
  %753 = vmatpush1.msra.mxu0 0.0
  %754 = vmatprep.subr.mxu0 0.0
  %755 = vmatpush1.msra.mxu0 0.0
  %756 = vmatprep.subr.mxu0 0.0
  %757 = vmatpush1.msra.mxu0 0.0
  %758 = vmatprep.subr.mxu0 0.0
  %759 = vmatpush1.msra.mxu0 0.0
  %760 = vmatprep.subr.mxu0 0.0
  %761 = vmatpush1.msra.mxu0 0.0
  %762 = vmatprep.subr.mxu0 0.0
  %763 = vmatpush1.msra.mxu0 0.0
  %764 = vmatprep.subr.mxu0 0.0
  %765 = vmatpush1.msra.mxu0 0.0
  %766 = vmatprep.subr.mxu0 0.0
  %767 = vmatpush1.msra.mxu0 0.0
  %768 = vmatprep.subr.mxu0 0.0
  %769 = vmatpush1.msra.mxu0 0.0
  %770 = vmatprep.subr.mxu0 0.0
  %771 = vmatpush1.msra.mxu0 0.0
  %772 = vmatprep.subr.mxu0 0.0
  %773 = vmatpush1.msra.mxu0 0.0
  %774 = vmatprep.subr.mxu0 0.0
  %775 = vmatpush1.msra.mxu0 0.0
  %776 = vmatprep.subr.mxu0 0.0
  %777 = vmatpush1.msra.mxu0 0.0
  %778 = vmatprep.subr.mxu0 0.0
  %779 = vmatpush1.msra.mxu0 0.0
  %780 = vmatprep.subr.mxu0 0.0
  %781 = vmatpush1.msra.mxu0 0.0
  %782 = vmatprep.subr.mxu0 0.0
  %783 = vmatpush1.msra.mxu0 0.0
  %784 = vmatprep.mubr.f32.mxu0 0.0
  %v785 = vand.u32 %v525, 4294901760
  %786 = vmatmul.mubr.f32.gmra.mrb[0].mxu0 %v785
  %v787 = vpop.f32.mrb[0].mxu0
  %v788 = vadd.f32 %v637, %v787
  %v789 = vpop.f32.mrb[0].mxu0
  %790 = vdwg.mxu0
  %791 = vmatprep.subr.mxu0 0.0
  %v792 = vand.u32 %v526, 4294901760
  %v793 = vsub.f32 %v526, %v792
  %794 = vmatpush1.msra.mxu0 %v793
  %795 = vmatprep.subr.mxu0 0.0
  %v796 = vand.u32 %v527, 4294901760
  %v797 = vsub.f32 %v527, %v796
  %798 = vmatpush1.msra.mxu0 %v797
  %799 = vmatprep.subr.mxu0 0.0
  %v800 = vand.u32 %v528, 4294901760
  %v801 = vsub.f32 %v528, %v800
  %802 = vmatpush1.msra.mxu0 %v801
  %803 = vmatprep.subr.mxu0 0.0
  %v804 = vand.u32 %v529, 4294901760
  %v805 = vsub.f32 %v529, %v804
  %806 = vmatpush1.msra.mxu0 %v805
  %807 = vmatprep.subr.mxu0 0.0
  %v808 = vand.u32 %v530, 4294901760
  %v809 = vsub.f32 %v530, %v808
  %810 = vmatpush1.msra.mxu0 %v809
  %811 = vmatprep.subr.mxu0 0.0
  %v812 = vand.u32 %v531, 4294901760
  %v813 = vsub.f32 %v531, %v812
  %814 = vmatpush1.msra.mxu0 %v813
  %815 = vmatprep.subr.mxu0 0.0
  %v816 = vand.u32 %v532, 4294901760
  %v817 = vsub.f32 %v532, %v816
  %818 = vmatpush1.msra.mxu0 %v817
  %819 = vmatprep.subr.mxu0 0.0
  %v820 = vand.u32 %v533, 4294901760
  %v821 = vsub.f32 %v533, %v820
  %822 = vmatpush1.msra.mxu0 %v821
  %823 = vmatprep.subr.mxu0 0.0
  %v824 = vand.u32 %v534, 4294901760
  %v825 = vsub.f32 %v534, %v824
  %826 = vmatpush1.msra.mxu0 %v825
  %827 = vmatprep.subr.mxu0 0.0
  %v828 = vand.u32 %v535, 4294901760
  %v829 = vsub.f32 %v535, %v828
  %830 = vmatpush1.msra.mxu0 %v829
  %831 = vmatprep.subr.mxu0 0.0
  %v832 = vand.u32 %v536, 4294901760
  %v833 = vsub.f32 %v536, %v832
  %834 = vmatpush1.msra.mxu0 %v833
  %835 = vmatprep.subr.mxu0 0.0
  %v836 = vand.u32 %v537, 4294901760
  %v837 = vsub.f32 %v537, %v836
  %838 = vmatpush1.msra.mxu0 %v837
  %839 = vmatprep.subr.mxu0 0.0
  %v840 = vand.u32 %v538, 4294901760
  %v841 = vsub.f32 %v538, %v840
  %842 = vmatpush1.msra.mxu0 %v841
  %843 = vmatprep.subr.mxu0 0.0
  %v844 = vand.u32 %v539, 4294901760
  %v845 = vsub.f32 %v539, %v844
  %846 = vmatpush1.msra.mxu0 %v845
  %847 = vmatprep.subr.mxu0 0.0
  %v848 = vand.u32 %v540, 4294901760
  %v849 = vsub.f32 %v540, %v848
  %850 = vmatpush1.msra.mxu0 %v849
  %851 = vmatprep.subr.mxu0 0.0
  %v852 = vand.u32 %v541, 4294901760
  %v853 = vsub.f32 %v541, %v852
  %854 = vmatpush1.msra.mxu0 %v853
  %855 = vmatprep.subr.mxu0 0.0
  %856 = vmatpush1.msra.mxu0 0.0
  %857 = vmatprep.subr.mxu0 0.0
  %858 = vmatpush1.msra.mxu0 0.0
  %859 = vmatprep.subr.mxu0 0.0
  %860 = vmatpush1.msra.mxu0 0.0
  %861 = vmatprep.subr.mxu0 0.0
  %862 = vmatpush1.msra.mxu0 0.0
  %863 = vmatprep.subr.mxu0 0.0
  %864 = vmatpush1.msra.mxu0 0.0
  %865 = vmatprep.subr.mxu0 0.0
  %866 = vmatpush1.msra.mxu0 0.0
  %867 = vmatprep.subr.mxu0 0.0
  %868 = vmatpush1.msra.mxu0 0.0
  %869 = vmatprep.subr.mxu0 0.0
  %870 = vmatpush1.msra.mxu0 0.0
  %871 = vmatprep.subr.mxu0 0.0
  %872 = vmatpush1.msra.mxu0 0.0
  %873 = vmatprep.subr.mxu0 0.0
  %874 = vmatpush1.msra.mxu0 0.0
  %875 = vmatprep.subr.mxu0 0.0
  %876 = vmatpush1.msra.mxu0 0.0
  %877 = vmatprep.subr.mxu0 0.0
  %878 = vmatpush1.msra.mxu0 0.0
  %879 = vmatprep.subr.mxu0 0.0
  %880 = vmatpush1.msra.mxu0 0.0
  %881 = vmatprep.subr.mxu0 0.0
  %882 = vmatpush1.msra.mxu0 0.0
  %883 = vmatprep.subr.mxu0 0.0
  %884 = vmatpush1.msra.mxu0 0.0
  %885 = vmatprep.subr.mxu0 0.0
  %886 = vmatpush1.msra.mxu0 0.0
  %887 = vmatprep.mubr.f32.mxu0 0.0
  %v888 = vand.u32 %v525, 4294901760
  %v889 = vsub.f32 %v525, %v888
  %890 = vmatmul.mubr.f32.gmra.mrb[0].mxu0 %v889
  %v891 = vpop.f32.mrb[0].mxu0
  %v892 = vadd.f32 %v788, %v891
  %v893 = vpop.f32.mrb[0].mxu0
  %894 = vdwg.mxu0
  %895 = vmatprep.subr.mxu0 0.0
  %v896 = vand.u32 %v526, 4294901760
  %897 = vmatpush1.msra.mxu0 %v896
  %898 = vmatprep.subr.mxu0 0.0
  %v899 = vand.u32 %v527, 4294901760
  %900 = vmatpush1.msra.mxu0 %v899
  %901 = vmatprep.subr.mxu0 0.0
  %v902 = vand.u32 %v528, 4294901760
  %903 = vmatpush1.msra.mxu0 %v902
  %904 = vmatprep.subr.mxu0 0.0
  %v905 = vand.u32 %v529, 4294901760
  %906 = vmatpush1.msra.mxu0 %v905
  %907 = vmatprep.subr.mxu0 0.0
  %v908 = vand.u32 %v530, 4294901760
  %909 = vmatpush1.msra.mxu0 %v908
  %910 = vmatprep.subr.mxu0 0.0
  %v911 = vand.u32 %v531, 4294901760
  %912 = vmatpush1.msra.mxu0 %v911
  %913 = vmatprep.subr.mxu0 0.0
  %v914 = vand.u32 %v532, 4294901760
  %915 = vmatpush1.msra.mxu0 %v914
  %916 = vmatprep.subr.mxu0 0.0
  %v917 = vand.u32 %v533, 4294901760
  %918 = vmatpush1.msra.mxu0 %v917
  %919 = vmatprep.subr.mxu0 0.0
  %v920 = vand.u32 %v534, 4294901760
  %921 = vmatpush1.msra.mxu0 %v920
  %922 = vmatprep.subr.mxu0 0.0
  %v923 = vand.u32 %v535, 4294901760
  %924 = vmatpush1.msra.mxu0 %v923
  %925 = vmatprep.subr.mxu0 0.0
  %v926 = vand.u32 %v536, 4294901760
  %927 = vmatpush1.msra.mxu0 %v926
  %928 = vmatprep.subr.mxu0 0.0
  %v929 = vand.u32 %v537, 4294901760
  %930 = vmatpush1.msra.mxu0 %v929
  %931 = vmatprep.subr.mxu0 0.0
  %v932 = vand.u32 %v538, 4294901760
  %933 = vmatpush1.msra.mxu0 %v932
  %934 = vmatprep.subr.mxu0 0.0
  %v935 = vand.u32 %v539, 4294901760
  %936 = vmatpush1.msra.mxu0 %v935
  %937 = vmatprep.subr.mxu0 0.0
  %v938 = vand.u32 %v540, 4294901760
  %939 = vmatpush1.msra.mxu0 %v938
  %940 = vmatprep.subr.mxu0 0.0
  %v941 = vand.u32 %v541, 4294901760
  %942 = vmatpush1.msra.mxu0 %v941
  %943 = vmatprep.subr.mxu0 0.0
  %944 = vmatpush1.msra.mxu0 0.0
  %945 = vmatprep.subr.mxu0 0.0
  %946 = vmatpush1.msra.mxu0 0.0
  %947 = vmatprep.subr.mxu0 0.0
  %948 = vmatpush1.msra.mxu0 0.0
  %949 = vmatprep.subr.mxu0 0.0
  %950 = vmatpush1.msra.mxu0 0.0
  %951 = vmatprep.subr.mxu0 0.0
  %952 = vmatpush1.msra.mxu0 0.0
  %953 = vmatprep.subr.mxu0 0.0
  %954 = vmatpush1.msra.mxu0 0.0
  %955 = vmatprep.subr.mxu0 0.0
  %956 = vmatpush1.msra.mxu0 0.0
  %957 = vmatprep.subr.mxu0 0.0
  %958 = vmatpush1.msra.mxu0 0.0
  %959 = vmatprep.subr.mxu0 0.0
  %960 = vmatpush1.msra.mxu0 0.0
  %961 = vmatprep.subr.mxu0 0.0
  %962 = vmatpush1.msra.mxu0 0.0
  %963 = vmatprep.subr.mxu0 0.0
  %964 = vmatpush1.msra.mxu0 0.0
  %965 = vmatprep.subr.mxu0 0.0
  %966 = vmatpush1.msra.mxu0 0.0
  %967 = vmatprep.subr.mxu0 0.0
  %968 = vmatpush1.msra.mxu0 0.0
  %969 = vmatprep.subr.mxu0 0.0
  %970 = vmatpush1.msra.mxu0 0.0
  %971 = vmatprep.subr.mxu0 0.0
  %972 = vmatpush1.msra.mxu0 0.0
  %973 = vmatprep.subr.mxu0 0.0
  %974 = vmatpush1.msra.mxu0 0.0
  %975 = vmatprep.mubr.f32.mxu0 0.0
  %v976 = vand.u32 %v525, 4294901760
  %v977 = vsub.f32 %v525, %v976
  %v978 = vand.u32 %v977, 4294901760
  %979 = vmatmul.mubr.f32.gmra.mrb[0].mxu0 %v978
  %v980 = vpop.f32.mrb[0].mxu0
  %v981 = vadd.f32 %v892, %v980
  %v982 = vpop.f32.mrb[0].mxu0
  %983 = vdwg.mxu0
  %984 = vmatprep.subr.mxu0 0.0
  %v985 = vand.u32 %v526, 4294901760
  %v986 = vsub.f32 %v526, %v985
  %v987 = vand.u32 %v986, 4294901760
  %988 = vmatpush1.msra.mxu0 %v987
  %989 = vmatprep.subr.mxu0 0.0
  %v990 = vand.u32 %v527, 4294901760
  %v991 = vsub.f32 %v527, %v990
  %v992 = vand.u32 %v991, 4294901760
  %993 = vmatpush1.msra.mxu0 %v992
  %994 = vmatprep.subr.mxu0 0.0
  %v995 = vand.u32 %v528, 4294901760
  %v996 = vsub.f32 %v528, %v995
  %v997 = vand.u32 %v996, 4294901760
  %998 = vmatpush1.msra.mxu0 %v997
  %999 = vmatprep.subr.mxu0 0.0
  %v1000 = vand.u32 %v529, 4294901760
  %v1001 = vsub.f32 %v529, %v1000
  %v1002 = vand.u32 %v1001, 4294901760
  %1003 = vmatpush1.msra.mxu0 %v1002
  %1004 = vmatprep.subr.mxu0 0.0
  %v1005 = vand.u32 %v530, 4294901760
  %v1006 = vsub.f32 %v530, %v1005
  %v1007 = vand.u32 %v1006, 4294901760
  %1008 = vmatpush1.msra.mxu0 %v1007
  %1009 = vmatprep.subr.mxu0 0.0
  %v1010 = vand.u32 %v531, 4294901760
  %v1011 = vsub.f32 %v531, %v1010
  %v1012 = vand.u32 %v1011, 4294901760
  %1013 = vmatpush1.msra.mxu0 %v1012
  %1014 = vmatprep.subr.mxu0 0.0
  %v1015 = vand.u32 %v532, 4294901760
  %v1016 = vsub.f32 %v532, %v1015
  %v1017 = vand.u32 %v1016, 4294901760
  %1018 = vmatpush1.msra.mxu0 %v1017
  %1019 = vmatprep.subr.mxu0 0.0
  %v1020 = vand.u32 %v533, 4294901760
  %v1021 = vsub.f32 %v533, %v1020
  %v1022 = vand.u32 %v1021, 4294901760
  %1023 = vmatpush1.msra.mxu0 %v1022
  %1024 = vmatprep.subr.mxu0 0.0
  %v1025 = vand.u32 %v534, 4294901760
  %v1026 = vsub.f32 %v534, %v1025
  %v1027 = vand.u32 %v1026, 4294901760
  %1028 = vmatpush1.msra.mxu0 %v1027
  %1029 = vmatprep.subr.mxu0 0.0
  %v1030 = vand.u32 %v535, 4294901760
  %v1031 = vsub.f32 %v535, %v1030
  %v1032 = vand.u32 %v1031, 4294901760
  %1033 = vmatpush1.msra.mxu0 %v1032
  %1034 = vmatprep.subr.mxu0 0.0
  %v1035 = vand.u32 %v536, 4294901760
  %v1036 = vsub.f32 %v536, %v1035
  %v1037 = vand.u32 %v1036, 4294901760
  %1038 = vmatpush1.msra.mxu0 %v1037
  %1039 = vmatprep.subr.mxu0 0.0
  %v1040 = vand.u32 %v537, 4294901760
  %v1041 = vsub.f32 %v537, %v1040
  %v1042 = vand.u32 %v1041, 4294901760
  %1043 = vmatpush1.msra.mxu0 %v1042
  %1044 = vmatprep.subr.mxu0 0.0
  %v1045 = vand.u32 %v538, 4294901760
  %v1046 = vsub.f32 %v538, %v1045
  %v1047 = vand.u32 %v1046, 4294901760
  %1048 = vmatpush1.msra.mxu0 %v1047
  %1049 = vmatprep.subr.mxu0 0.0
  %v1050 = vand.u32 %v539, 4294901760
  %v1051 = vsub.f32 %v539, %v1050
  %v1052 = vand.u32 %v1051, 4294901760
  %1053 = vmatpush1.msra.mxu0 %v1052
  %1054 = vmatprep.subr.mxu0 0.0
  %v1055 = vand.u32 %v540, 4294901760
  %v1056 = vsub.f32 %v540, %v1055
  %v1057 = vand.u32 %v1056, 4294901760
  %1058 = vmatpush1.msra.mxu0 %v1057
  %1059 = vmatprep.subr.mxu0 0.0
  %v1060 = vand.u32 %v541, 4294901760
  %v1061 = vsub.f32 %v541, %v1060
  %v1062 = vand.u32 %v1061, 4294901760
  %1063 = vmatpush1.msra.mxu0 %v1062
  %1064 = vmatprep.subr.mxu0 0.0
  %1065 = vmatpush1.msra.mxu0 0.0
  %1066 = vmatprep.subr.mxu0 0.0
  %1067 = vmatpush1.msra.mxu0 0.0
  %1068 = vmatprep.subr.mxu0 0.0
  %1069 = vmatpush1.msra.mxu0 0.0
  %1070 = vmatprep.subr.mxu0 0.0
  %1071 = vmatpush1.msra.mxu0 0.0
  %1072 = vmatprep.subr.mxu0 0.0
  %1073 = vmatpush1.msra.mxu0 0.0
  %1074 = vmatprep.subr.mxu0 0.0
  %1075 = vmatpush1.msra.mxu0 0.0
  %1076 = vmatprep.subr.mxu0 0.0
  %1077 = vmatpush1.msra.mxu0 0.0
  %1078 = vmatprep.subr.mxu0 0.0
  %1079 = vmatpush1.msra.mxu0 0.0
  %1080 = vmatprep.subr.mxu0 0.0
  %1081 = vmatpush1.msra.mxu0 0.0
  %1082 = vmatprep.subr.mxu0 0.0
  %1083 = vmatpush1.msra.mxu0 0.0
  %1084 = vmatprep.subr.mxu0 0.0
  %1085 = vmatpush1.msra.mxu0 0.0
  %1086 = vmatprep.subr.mxu0 0.0
  %1087 = vmatpush1.msra.mxu0 0.0
  %1088 = vmatprep.subr.mxu0 0.0
  %1089 = vmatpush1.msra.mxu0 0.0
  %1090 = vmatprep.subr.mxu0 0.0
  %1091 = vmatpush1.msra.mxu0 0.0
  %1092 = vmatprep.subr.mxu0 0.0
  %1093 = vmatpush1.msra.mxu0 0.0
  %1094 = vmatprep.subr.mxu0 0.0
  %1095 = vmatpush1.msra.mxu0 0.0
  %1096 = vmatprep.mubr.f32.mxu0 0.0
  %v1097 = vand.u32 %v525, 4294901760
  %1098 = vmatmul.mubr.f32.gmra.mrb[0].mxu0 %v1097
  %v1099 = vpop.f32.mrb[0].mxu0
  %v1100 = vadd.f32 %v981, %v1099
  %v1101 = vpop.f32.mrb[0].mxu0
  %1102 = vdwg.mxu0
  %1103 = vmatprep.subr.mxu0 0.0
  %v1104 = vand.u32 %v526, 4294901760
  %1105 = vmatpush1.msra.mxu0 %v1104
  %1106 = vmatprep.subr.mxu0 0.0
  %v1107 = vand.u32 %v527, 4294901760
  %1108 = vmatpush1.msra.mxu0 %v1107
  %1109 = vmatprep.subr.mxu0 0.0
  %v1110 = vand.u32 %v528, 4294901760
  %1111 = vmatpush1.msra.mxu0 %v1110
  %1112 = vmatprep.subr.mxu0 0.0
  %v1113 = vand.u32 %v529, 4294901760
  %1114 = vmatpush1.msra.mxu0 %v1113
  %1115 = vmatprep.subr.mxu0 0.0
  %v1116 = vand.u32 %v530, 4294901760
  %1117 = vmatpush1.msra.mxu0 %v1116
  %1118 = vmatprep.subr.mxu0 0.0
  %v1119 = vand.u32 %v531, 4294901760
  %1120 = vmatpush1.msra.mxu0 %v1119
  %1121 = vmatprep.subr.mxu0 0.0
  %v1122 = vand.u32 %v532, 4294901760
  %1123 = vmatpush1.msra.mxu0 %v1122
  %1124 = vmatprep.subr.mxu0 0.0
  %v1125 = vand.u32 %v533, 4294901760
  %1126 = vmatpush1.msra.mxu0 %v1125
  %1127 = vmatprep.subr.mxu0 0.0
  %v1128 = vand.u32 %v534, 4294901760
  %1129 = vmatpush1.msra.mxu0 %v1128
  %1130 = vmatprep.subr.mxu0 0.0
  %v1131 = vand.u32 %v535, 4294901760
  %1132 = vmatpush1.msra.mxu0 %v1131
  %1133 = vmatprep.subr.mxu0 0.0
  %v1134 = vand.u32 %v536, 4294901760
  %1135 = vmatpush1.msra.mxu0 %v1134
  %1136 = vmatprep.subr.mxu0 0.0
  %v1137 = vand.u32 %v537, 4294901760
  %1138 = vmatpush1.msra.mxu0 %v1137
  %1139 = vmatprep.subr.mxu0 0.0
  %v1140 = vand.u32 %v538, 4294901760
  %1141 = vmatpush1.msra.mxu0 %v1140
  %1142 = vmatprep.subr.mxu0 0.0
  %v1143 = vand.u32 %v539, 4294901760
  %1144 = vmatpush1.msra.mxu0 %v1143
  %1145 = vmatprep.subr.mxu0 0.0
  %v1146 = vand.u32 %v540, 4294901760
  %1147 = vmatpush1.msra.mxu0 %v1146
  %1148 = vmatprep.subr.mxu0 0.0
  %v1149 = vand.u32 %v541, 4294901760
  %1150 = vmatpush1.msra.mxu0 %v1149
  %1151 = vmatprep.subr.mxu0 0.0
  %1152 = vmatpush1.msra.mxu0 0.0
  %1153 = vmatprep.subr.mxu0 0.0
  %1154 = vmatpush1.msra.mxu0 0.0
  %1155 = vmatprep.subr.mxu0 0.0
  %1156 = vmatpush1.msra.mxu0 0.0
  %1157 = vmatprep.subr.mxu0 0.0
  %1158 = vmatpush1.msra.mxu0 0.0
  %1159 = vmatprep.subr.mxu0 0.0
  %1160 = vmatpush1.msra.mxu0 0.0
  %1161 = vmatprep.subr.mxu0 0.0
  %1162 = vmatpush1.msra.mxu0 0.0
  %1163 = vmatprep.subr.mxu0 0.0
  %1164 = vmatpush1.msra.mxu0 0.0
  %1165 = vmatprep.subr.mxu0 0.0
  %1166 = vmatpush1.msra.mxu0 0.0
  %1167 = vmatprep.subr.mxu0 0.0
  %1168 = vmatpush1.msra.mxu0 0.0
  %1169 = vmatprep.subr.mxu0 0.0
  %1170 = vmatpush1.msra.mxu0 0.0
  %1171 = vmatprep.subr.mxu0 0.0
  %1172 = vmatpush1.msra.mxu0 0.0
  %1173 = vmatprep.subr.mxu0 0.0
  %1174 = vmatpush1.msra.mxu0 0.0
  %1175 = vmatprep.subr.mxu0 0.0
  %1176 = vmatpush1.msra.mxu0 0.0
  %1177 = vmatprep.subr.mxu0 0.0
  %1178 = vmatpush1.msra.mxu0 0.0
  %1179 = vmatprep.subr.mxu0 0.0
  %1180 = vmatpush1.msra.mxu0 0.0
  %1181 = vmatprep.subr.mxu0 0.0
  %1182 = vmatpush1.msra.mxu0 0.0
  %1183 = vmatprep.mubr.f32.mxu0 0.0
  %v1184 = vand.u32 %v525, 4294901760
  %1185 = vmatmul.mubr.f32.gmra.mrb[0].mxu0 %v1184
  %v1186 = vpop.f32.mrb[0].mxu0
  %v1187 = vadd.f32 %v1100, %v1186
  %v1188 = vpop.f32.mrb[0].mxu0
  %1189 = vdwg.mxu0
  %vm1190 = vcmask 31744
  %1191 = vst.msk [vmem:[%s5] sm:$0xff] %vm1190, %v1187
  // Predicated region
  $region22: #{deep_q_forward_pallas.1} parent=0 // pred_check
    _
  $region23: #{deep_q_forward_pallas.1} parent=0 // pred_check_branch
    %1193 = sbr.rel (0) target = $region25
  $region24: #{deep_q_forward_pallas.1} parent=0 // pred_region
    _
  $region25: #{deep_q_forward_pallas.1} parent=0 // pred_fallthru
    _
  // Predicated region
  $region26: #{deep_q_forward_pallas.1} parent=0 // pred_check
    _
  $region27: #{deep_q_forward_pallas.1} parent=0 // pred_check_branch
    %1195 = sbr.rel (0) target = $region29
  $region28: #{deep_q_forward_pallas.1} parent=0 // pred_region
    _
  $region29: #{deep_q_forward_pallas.1} parent=0 // pred_fallthru
    _

</llo_original>
